<compile_context>
chip_gen: v7x
topology: tpu7x:2x2x1
jax: 0.10.0
libtpu: 0.0.40
codegen_flags: <defaults>
</compile_context>

<pallas_src>
import jax
import jax.numpy as jnp
from jax.experimental import pallas as pl
from jax.experimental.pallas import tpu as pltpu


def mlp_kernel(x_ref, w1_ref, b1_ref, w2_ref, b2_ref, w3_ref, b3_ref, o_ref):
    # Cast x to the matmul dtype after the DMA (VPU), not in the wrapper.
    x = x_ref[...].astype(w1_ref.dtype)

    # Layer 1: Linear(D, 64) + ReLU.  MXU accumulates in f32; bias/ReLU in f32.
    h1 = jnp.dot(x, w1_ref[...], preferred_element_type=jnp.float32) + b1_ref[...]
    h1 = jnp.maximum(h1, 0.0)

    # Dropout(0.3): identity in eval/inference mode.
    # TODO(synk): training-mode dropout (pltpu.prng_seed + prng_random_bits mask
    # with 1/(1-p) scaling) not implemented.

    # Layer 2: Linear(64, 32) + ReLU.
    h2 = jnp.dot(h1.astype(w2_ref.dtype), w2_ref[...],
                 preferred_element_type=jnp.float32) + b2_ref[...]
    h2 = jnp.maximum(h2, 0.0)

    # Layer 3: Linear(32, 2).  Output block last dim (2) equals the full array
    # dim, so the HBM writeback is only 8 B/row (no 128-lane padding).
    out = jnp.dot(h2.astype(w3_ref.dtype), w3_ref[...],
                  preferred_element_type=jnp.float32) + b3_ref[...]
    o_ref[...] = out.astype(o_ref.dtype)


def _round_up(n, m):
    return ((n + m - 1) // m) * m


def mlp_forward(x, params, *, tm=2048, compute_dtype=jnp.bfloat16):
    """x: (B, D_in). params: w1,b1,w2,b2,w3,b3 with weights in (in, out) layout."""
    B, D = x.shape
    H1 = params["w1"].shape[1]
    H2 = params["w2"].shape[1]
    OUT = params["w3"].shape[1]

    # Pad the batch only to the 8-row sublane granularity (<= 7 wasted rows),
    # NOT to a tile multiple.
    B_pad = _round_up(B, 8)
    if B_pad != B:
        x = jnp.pad(x, ((0, B_pad - B), (0, 0)))

    # Large tile to amortize per-step overhead; capped so a big batch always
    # yields >= 2 grid steps (v7x megacore sharding of the "parallel" axis).
    tm_eff = min(tm, _round_up(pl.cdiv(B_pad, 2), 8), B_pad)
    grid = (pl.cdiv(B_pad, tm_eff),)  # partial last block handled by Pallas

    # Weights to matmul dtype (tiny tensors, one-time cast); biases stay f32.
    w1 = params["w1"].astype(compute_dtype)
    w2 = params["w2"].astype(compute_dtype)
    w3 = params["w3"].astype(compute_dtype)
    b1 = params["b1"].astype(jnp.float32)
    b2 = params["b2"].astype(jnp.float32)
    b3 = params["b3"].astype(jnp.float32)

    # Weights/biases: whole tensor at every grid step (constant index_map) so
    # they stay resident in VMEM across the batch loop.
    full = lambda shape: pl.BlockSpec(shape, lambda i: (0, 0))

    flops = 2 * B_pad * (D * H1 + H1 * H2 + H2 * OUT)
    bytes_accessed = (
        x.size * x.dtype.itemsize
        + sum(a.size * a.dtype.itemsize for a in (w1, b1, w2, b2, w3, b3))
        + B_pad * OUT * 4
    )

    out = pl.pallas_call(
        mlp_kernel,
        out_shape=jax.ShapeDtypeStruct((B_pad, OUT), jnp.float32),
        grid=grid,
        in_specs=[
            pl.BlockSpec((tm_eff, D), lambda i: (i, 0)),   # x tile over batch
            full((D, H1)),
            full((1, H1)),
            full((H1, H2)),
            full((1, H2)),
            full((H2, OUT)),
            full((1, OUT)),
        ],
        out_specs=pl.BlockSpec((tm_eff, OUT), lambda i: (i, 0)),
        compiler_params=pltpu.CompilerParams(
            dimension_semantics=("parallel",),
        ),
        cost_estimate=pl.CostEstimate(
            flops=flops, transcendentals=0, bytes_accessed=bytes_accessed
        ),
    )(x, w1, b1, w2, b2, w3, b3)

    # Strip the (at most 7-row) batch padding.
    return out[:B] if B_pad != B else out


def init_params(key, input_size):
    """PyTorch-shaped init: Linear(input_size, 64), Linear(64, 32), Linear(32, 2)."""
    def linear_init(k, fan_in, fan_out):
        kw, kb = jax.random.split(k)
        bound = 1.0 / jnp.sqrt(fan_in)
        w = jax.random.uniform(kw, (fan_out, fan_in), jnp.float32, -bound, bound)
        b = jax.random.uniform(kb, (fan_out,), jnp.float32, -bound, bound)
        return w.T, b.reshape(1, fan_out)  # (in, out), (1, out)

    k1, k2, k3 = jax.random.split(key, 3)
    w1, b1 = linear_init(k1, input_size, 64)
    w2, b2 = linear_init(k2, 64, 32)
    w3, b3 = linear_init(k3, 32, 2)
    return {"w1": w1, "b1": b1, "w2": w2, "b2": b2, "w3": w3, "b3": b3}


def mlp_reference(x, p):
    h1 = jnp.maximum(x @ p["w1"] + p["b1"], 0.0)
    h2 = jnp.maximum(h1 @ p["w2"] + p["b2"], 0.0)
    return h2 @ p["w3"] + p["b3"]


if __name__ == "__main__":
    key = jax.random.PRNGKey(0)
    k_in, k_param = jax.random.split(key)

    batch = 8
    input_size = 32
    x = jax.random.normal(k_in, (batch, input_size), jnp.float32)
    params = init_params(k_param, input_size)
    ref = mlp_reference(x, params)

    # Production path: bf16 MXU inputs, f32 accumulation (loose tol from bf16 rounding).
    out_bf16 = jax.block_until_ready(mlp_forward(x, params))
    assert out_bf16.shape == (batch, 2), out_bf16.shape
    assert jnp.allclose(out_bf16, ref, atol=5e-2, rtol=5e-2), "bf16 path mismatch"

    # Exact path: full f32 compute (tight tolerance).
    out_f32 = jax.block_until_ready(mlp_forward(x, params, compute_dtype=jnp.float32))
    assert jnp.allclose(out_f32, ref, atol=1e-5, rtol=1e-5), "f32 path mismatch"

    # Non-multiple-of-8 batch exercises the (8-row) host padding path.
    x_odd = jax.random.normal(k_in, (5, input_size), jnp.float32)
    out_odd = jax.block_until_ready(mlp_forward(x_odd, params, compute_dtype=jnp.float32))
    assert out_odd.shape == (5, 2)
    assert jnp.allclose(out_odd, mlp_reference(x_odd, params), atol=1e-5, rtol=1e-5)

    # Batch not a multiple of the tile exercises the Pallas partial-block path.
    x_tail = jax.random.normal(k_in, (20, input_size), jnp.float32)
    out_tail = jax.block_until_ready(
        mlp_forward(x_tail, params, tm=16, compute_dtype=jnp.float32))
    assert out_tail.shape == (20, 2)
    assert jnp.allclose(out_tail, mlp_reference(x_tail, params), atol=1e-5, rtol=1e-5)

    print("KERNEL_OK")
</pallas_src>

<mosaic_0001>
module attributes {stable_mosaic.version = 11 : i64} {
  func.func @mlp_kernel(%arg0: i32, %arg1: memref<8x32xf32, #tpu.memory_space<vmem>>, %arg2: memref<32x64xbf16, #tpu.memory_space<vmem>>, %arg3: memref<1x64xf32, #tpu.memory_space<vmem>>, %arg4: memref<64x32xbf16, #tpu.memory_space<vmem>>, %arg5: memref<1x32xf32, #tpu.memory_space<vmem>>, %arg6: memref<32x2xbf16, #tpu.memory_space<vmem>>, %arg7: memref<1x2xf32, #tpu.memory_space<vmem>>, %arg8: memref<8x2xf32, #tpu.memory_space<vmem>>) attributes {dimension_semantics = [#tpu.dimension_semantics<parallel>], iteration_bounds = array<i64: 1>, scalar_prefetch = 0 : i64, scratch_operands = 0 : i64, tpu.core_type = #tpu.core_type<tc>, window_params = [{transform_indices = @transform_0, window_bounds = array<i64: 8, 32>}, {pipeline_mode = #tpu.pipeline_mode<synchronous>, transform_indices = @transform_1, window_bounds = array<i64: 32, 64>}, {pipeline_mode = #tpu.pipeline_mode<synchronous>, transform_indices = @transform_2, window_bounds = array<i64: 1, 64>}, {pipeline_mode = #tpu.pipeline_mode<synchronous>, transform_indices = @transform_3, window_bounds = array<i64: 64, 32>}, {pipeline_mode = #tpu.pipeline_mode<synchronous>, transform_indices = @transform_4, window_bounds = array<i64: 1, 32>}, {pipeline_mode = #tpu.pipeline_mode<synchronous>, transform_indices = @transform_5, window_bounds = array<i64: 32, 2>}, {pipeline_mode = #tpu.pipeline_mode<synchronous>, transform_indices = @transform_6, window_bounds = array<i64: 1, 2>}, {transform_indices = @transform_7, window_bounds = array<i64: 8, 2>}]} {
    %c0 = arith.constant 0 : index
    %c0_0 = arith.constant 0 : index
    %0 = vector.load %arg1[%c0, %c0_0] : memref<8x32xf32, #tpu.memory_space<vmem>>, vector<8x32xf32>
    %1 = arith.truncf %0 : vector<8x32xf32> to vector<8x32xbf16>
    %c0_1 = arith.constant 0 : index
    %c0_2 = arith.constant 0 : index
    %2 = vector.load %arg2[%c0_1, %c0_2] : memref<32x64xbf16, #tpu.memory_space<vmem>>, vector<32x64xbf16>
    %cst = arith.constant dense<0.000000e+00> : vector<8x64xf32>
    %3 = tpu.matmul %1, %2, %cst {dimension_numbers = #tpu.dot_dimension_numbers<[1], [0], [0], [1], [0, 0, 1, 1], [], []>} : vector<8x32xbf16>, vector<32x64xbf16>, vector<8x64xf32> -> vector<8x64xf32>
    %c0_3 = arith.constant 0 : index
    %c0_4 = arith.constant 0 : index
    %4 = vector.load %arg3[%c0_3, %c0_4] : memref<1x64xf32, #tpu.memory_space<vmem>>, vector<1x64xf32>
    %5 = vector.broadcast %4 : vector<1x64xf32> to vector<8x64xf32>
    %6 = arith.addf %3, %5 : vector<8x64xf32>
    %cst_5 = arith.constant 0.000000e+00 : f32
    %7 = vector.broadcast %cst_5 : f32 to vector<8x64xf32>
    %8 = arith.maximumf %6, %7 : vector<8x64xf32>
    %9 = arith.truncf %8 : vector<8x64xf32> to vector<8x64xbf16>
    %c0_6 = arith.constant 0 : index
    %c0_7 = arith.constant 0 : index
    %10 = vector.load %arg4[%c0_6, %c0_7] : memref<64x32xbf16, #tpu.memory_space<vmem>>, vector<64x32xbf16>
    %cst_8 = arith.constant dense<0.000000e+00> : vector<8x32xf32>
    %11 = tpu.matmul %9, %10, %cst_8 {dimension_numbers = #tpu.dot_dimension_numbers<[1], [0], [0], [1], [0, 0, 1, 1], [], []>} : vector<8x64xbf16>, vector<64x32xbf16>, vector<8x32xf32> -> vector<8x32xf32>
    %c0_9 = arith.constant 0 : index
    %c0_10 = arith.constant 0 : index
    %12 = vector.load %arg5[%c0_9, %c0_10] : memref<1x32xf32, #tpu.memory_space<vmem>>, vector<1x32xf32>
    %13 = vector.broadcast %12 : vector<1x32xf32> to vector<8x32xf32>
    %14 = arith.addf %11, %13 : vector<8x32xf32>
    %cst_11 = arith.constant 0.000000e+00 : f32
    %15 = vector.broadcast %cst_11 : f32 to vector<8x32xf32>
    %16 = arith.maximumf %14, %15 : vector<8x32xf32>
    %17 = arith.truncf %16 : vector<8x32xf32> to vector<8x32xbf16>
    %c0_12 = arith.constant 0 : index
    %c0_13 = arith.constant 0 : index
    %18 = vector.load %arg6[%c0_12, %c0_13] : memref<32x2xbf16, #tpu.memory_space<vmem>>, vector<32x2xbf16>
    %cst_14 = arith.constant dense<0.000000e+00> : vector<8x2xf32>
    %19 = tpu.matmul %17, %18, %cst_14 {dimension_numbers = #tpu.dot_dimension_numbers<[1], [0], [0], [1], [0, 0, 1, 1], [], []>} : vector<8x32xbf16>, vector<32x2xbf16>, vector<8x2xf32> -> vector<8x2xf32>
    %c0_15 = arith.constant 0 : index
    %c0_16 = arith.constant 0 : index
    %20 = vector.load %arg7[%c0_15, %c0_16] : memref<1x2xf32, #tpu.memory_space<vmem>>, vector<1x2xf32>
    %21 = vector.broadcast %20 : vector<1x2xf32> to vector<8x2xf32>
    %22 = arith.addf %19, %21 : vector<8x2xf32>
    %c0_17 = arith.constant 0 : index
    %c0_18 = arith.constant 0 : index
    %23 = vector.load %arg8[%c0_17, %c0_18] : memref<8x2xf32, #tpu.memory_space<vmem>>, vector<8x2xf32>
    tpu.vector_store %arg8[%c0_17, %c0_18], %22 {strides = array<i32>} : memref<8x2xf32, #tpu.memory_space<vmem>>, vector<8x2xf32>,
    return
  }
  func.func @transform_0(%arg0: i32) -> (i32, i32) {
    %c0_i32 = arith.constant 0 : i32
    %c0_i32_0 = arith.constant 0 : i32
    return %arg0, %c0_i32 : i32, i32
  }
  func.func @transform_1(%arg0: i32) -> (i32, i32) {
    %c0_i32 = arith.constant 0 : i32
    %c0_i32_0 = arith.constant 0 : i32
    %c0_i32_1 = arith.constant 0 : i32
    return %c0_i32, %c0_i32_0 : i32, i32
  }
  func.func @transform_2(%arg0: i32) -> (i32, i32) {
    %c0_i32 = arith.constant 0 : i32
    %c0_i32_0 = arith.constant 0 : i32
    %c0_i32_1 = arith.constant 0 : i32
    return %c0_i32, %c0_i32_0 : i32, i32
  }
  func.func @transform_3(%arg0: i32) -> (i32, i32) {
    %c0_i32 = arith.constant 0 : i32
    %c0_i32_0 = arith.constant 0 : i32
    %c0_i32_1 = arith.constant 0 : i32
    return %c0_i32, %c0_i32_0 : i32, i32
  }
  func.func @transform_4(%arg0: i32) -> (i32, i32) {
    %c0_i32 = arith.constant 0 : i32
    %c0_i32_0 = arith.constant 0 : i32
    %c0_i32_1 = arith.constant 0 : i32
    return %c0_i32, %c0_i32_0 : i32, i32
  }
  func.func @transform_5(%arg0: i32) -> (i32, i32) {
    %c0_i32 = arith.constant 0 : i32
    %c0_i32_0 = arith.constant 0 : i32
    %c0_i32_1 = arith.constant 0 : i32
    return %c0_i32, %c0_i32_0 : i32, i32
  }
  func.func @transform_6(%arg0: i32) -> (i32, i32) {
    %c0_i32 = arith.constant 0 : i32
    %c0_i32_0 = arith.constant 0 : i32
    %c0_i32_1 = arith.constant 0 : i32
    return %c0_i32, %c0_i32_0 : i32, i32
  }
  func.func @transform_7(%arg0: i32) -> (i32, i32) {
    %c0_i32 = arith.constant 0 : i32
    %c0_i32_0 = arith.constant 0 : i32
    return %arg0, %c0_i32 : i32, i32
  }
}

</mosaic_0001>

<llo_original>
// kernel: tpu_custom_call.1
$region0: #{tpu_custom_call.1}
  #allocation0 [shape = 'u32[]', space=smem, size = 0x4, offset = 0x4, fixed_abs, tag = 'smem constant byte address 0x4 - core index']
  #allocation1 [shape = 'u32[144,128]{1,0:T(1,128)}', space=vmem, size = 0x12000, scoped, tag = 'internal scratch']
  %s0 = inlined_call_operand.vmem [shape: f32[8,32], index: 0, kind: input, shape index: {}]
  %s1 = inlined_call_operand.vmem [shape: bf16[32,64], index: 1, kind: input, shape index: {}]
  %s2 = inlined_call_operand.vmem [shape: f32[1,64], index: 2, kind: input, shape index: {}]
  %s3 = inlined_call_operand.vmem [shape: bf16[64,32], index: 3, kind: input, shape index: {}]
  %s4 = inlined_call_operand.vmem [shape: f32[1,32], index: 4, kind: input, shape index: {}]
  %s5 = inlined_call_operand.vmem [shape: bf16[32,2], index: 5, kind: input, shape index: {}]
  %s6 = inlined_call_operand.vmem [shape: f32[1,2], index: 6, kind: input, shape index: {}]
  %s7 = inlined_call_operand.vmem [shape: f32[8,2], index: 7, kind: output, shape index: {}]
  %s8 = sld [smem:[#allocation0]]
  $region38: #{tpu_custom_call.1} parent=0
    _
  %s10 = ssub.s32 1, %s8
  %s11 = scalar_select 0, %s10, %s8
  // Predicated region
  $region2: #{tpu_custom_call.1} parent=0 // pred_check
    _
  $region3: #{tpu_custom_call.1} parent=0 // pred_check_branch
    %13 = sbr.rel (0) target = $region5
  $region4: #{tpu_custom_call.1} parent=0 // pred_region
    _
  $region5: #{tpu_custom_call.1} parent=0 // pred_fallthru
    _
  // Predicated region
  $region6: #{tpu_custom_call.1} parent=0 // pred_check
    _
  $region7: #{tpu_custom_call.1} parent=0 // pred_check_branch
    %15 = sbr.rel (0) target = $region9
  $region8: #{tpu_custom_call.1} parent=0 // pred_region
    _
  $region9: #{tpu_custom_call.1} parent=0 // pred_fallthru
    _
  // Predicated region
  $region10: #{tpu_custom_call.1} parent=0 // pred_check
    _
  $region11: #{tpu_custom_call.1} parent=0 // pred_check_branch
    %17 = sbr.rel (0) target = $region13
  $region12: #{tpu_custom_call.1} parent=0 // pred_region
    _
  $region13: #{tpu_custom_call.1} parent=0 // pred_fallthru
    _
  // Predicated region
  $region14: #{tpu_custom_call.1} parent=0 // pred_check
    _
  $region15: #{tpu_custom_call.1} parent=0 // pred_check_branch
    %19 = sbr.rel (0) target = $region17
  $region16: #{tpu_custom_call.1} parent=0 // pred_region
    _
  $region17: #{tpu_custom_call.1} parent=0 // pred_fallthru
    _
  // Predicated region
  $region18: #{tpu_custom_call.1} parent=0 // pred_check
    _
  $region19: #{tpu_custom_call.1} parent=0 // pred_check_branch
    %21 = sbr.rel (0) target = $region21
  $region20: #{tpu_custom_call.1} parent=0 // pred_region
    _
  $region21: #{tpu_custom_call.1} parent=0 // pred_fallthru
    _
  // Predicated region
  $region22: #{tpu_custom_call.1} parent=0 // pred_check
    _
  $region23: #{tpu_custom_call.1} parent=0 // pred_check_branch
    %23 = sbr.rel (0) target = $region25
  $region24: #{tpu_custom_call.1} parent=0 // pred_region
    _
  $region25: #{tpu_custom_call.1} parent=0 // pred_fallthru
    _
  // Predicated region
  $region26: #{tpu_custom_call.1} parent=0 // pred_check
    _
  $region27: #{tpu_custom_call.1} parent=0 // pred_check_branch
    %25 = sbr.rel (0) target = $region29
  $region28: #{tpu_custom_call.1} parent=0 // pred_region
    _
  $region29: #{tpu_custom_call.1} parent=0 // pred_fallthru
    _
  %v27 = vld [vmem:[%s0] sm:$0xff]
  %v28 = vpack.c.bf16 %v27, %v27
  %v29 = vld [vmem:[%s1] sm:$0xf]
  %v30 = vld [vmem:[%s1 + $0x4] sm:$0xf]
  %v31 = vld [vmem:[%s1 + $0x8] sm:$0xf]
  %v32 = vld [vmem:[%s1 + $0xc] sm:$0xf]
  %v33 = vld [vmem:[%s2] sm:$0x1]
  %v35 = vlaneseq
  %v36 = vshrl.u32 %v35, 7
  %v37 = vsub.s32 0, %v36
  %v38 = vrot.slane %v33, %v37
  %v44 = vunpack.c.l.b16 %v29
  %v45 = vunpack.c.l.b16 %v30
  %v46 = vunpack.c.l.b16 %v31
  %v47 = vunpack.c.l.b16 %v32
  %v48 = vpack.c.b16 %v45, %v44
  %v49 = vpack.c.b16 %v47, %v46
  %vm52 = vcmask 261120
  %v54 = vsel %vm52, %v28, 0
  %56 = vmatprep.subr.bf16.mxu0 0
  %57 = vmatpush1.bf16.msra.mxu0 %v48
  %58 = vmatprep.subr.bf16.mxu0 0
  %59 = vmatpush1.bf16.msra.mxu0 %v49
  %60 = vmatprep.subr.bf16.mxu0 0
  %61 = vmatpush1.bf16.msra.mxu0 0
  %62 = vmatprep.subr.bf16.mxu0 0
  %63 = vmatpush1.bf16.msra.mxu0 0
  %64 = vmatprep.subr.bf16.mxu0 0
  %65 = vmatpush1.bf16.msra.mxu0 0
  %66 = vmatprep.subr.bf16.mxu0 0
  %67 = vmatpush1.bf16.msra.mxu0 0
  %68 = vmatprep.subr.bf16.mxu0 0
  %69 = vmatpush1.bf16.msra.mxu0 0
  %70 = vmatprep.subr.bf16.mxu0 0
  %71 = vmatpush1.bf16.msra.mxu0 0
  %72 = vmatprep.subr.bf16.mxu0 0
  %73 = vmatpush1.bf16.msra.mxu0 0
  %74 = vmatprep.subr.bf16.mxu0 0
  %75 = vmatpush1.bf16.msra.mxu0 0
  %76 = vmatprep.subr.bf16.mxu0 0
  %77 = vmatpush1.bf16.msra.mxu0 0
  %78 = vmatprep.subr.bf16.mxu0 0
  %79 = vmatpush1.bf16.msra.mxu0 0
  %80 = vmatprep.subr.bf16.mxu0 0
  %81 = vmatpush1.bf16.msra.mxu0 0
  %82 = vmatprep.subr.bf16.mxu0 0
  %83 = vmatpush1.bf16.msra.mxu0 0
  %84 = vmatprep.subr.bf16.mxu0 0
  %85 = vmatpush1.bf16.msra.mxu0 0
  %86 = vmatprep.subr.bf16.mxu0 0
  %87 = vmatpush1.bf16.msra.mxu0 0
  %88 = vmatprep.mubr.bf16.mxu0 0
  %89 = vmatmul.mubr.bf16.gmra.mrb[0].mxu0 %v54
  %v90 = vpop.f32.mrb[0].mxu0
  %v91 = vadd.f32 %v38, %v90
  %v92 = vpop.f32.mrb[0].mxu0
  %v93 = vpop.f32.mrb[0].mxu0
  %v94 = vpop.f32.mrb[0].mxu0
  %95 = vdwg.mxu0
  %v96 = vmax.f32 %v91, 0.0
  %v97 = vpack.c.bf16 %v96, %v96
  %v98 = vld [vmem:[%s3] sm:$0xf]
  %v99 = vld [vmem:[%s3 + $0x4] sm:$0xf]
  %v100 = vld [vmem:[%s3 + $0x8] sm:$0xf]
  %v101 = vld [vmem:[%s3 + $0xc] sm:$0xf]
  %v102 = vld [vmem:[%s3 + $0x10] sm:$0xf]
  %v103 = vld [vmem:[%s3 + $0x14] sm:$0xf]
  %v104 = vld [vmem:[%s3 + $0x18] sm:$0xf]
  %v105 = vld [vmem:[%s3 + $0x1c] sm:$0xf]
  %v106 = vld [vmem:[%s4] sm:$0x1]
  %v108 = vlaneseq
  %v109 = vshrl.u32 %v108, 7
  %v110 = vsub.s32 0, %v109
  %v111 = vrot.slane %v106, %v110
  %v121 = vunpack.c.l.b16 %v98
  %v122 = vunpack.c.l.b16 %v99
  %v123 = vunpack.c.l.b16 %v100
  %v124 = vunpack.c.l.b16 %v101
  %v125 = vunpack.c.l.b16 %v102
  %v126 = vunpack.c.l.b16 %v103
  %v127 = vunpack.c.l.b16 %v104
  %v128 = vunpack.c.l.b16 %v105
  %v129 = vpack.c.b16 %v122, %v121
  %v130 = vpack.c.b16 %v124, %v123
  %v131 = vpack.c.b16 %v126, %v125
  %v132 = vpack.c.b16 %v128, %v127
  %vm137 = vcmask 523264
  %v139 = vsel %vm137, %v97, 0
  %141 = vmatprep.subr.bf16.mxu0 0
  %142 = vmatpush1.bf16.msra.mxu0 %v129
  %143 = vmatprep.subr.bf16.mxu0 0
  %144 = vmatpush1.bf16.msra.mxu0 %v130
  %145 = vmatprep.subr.bf16.mxu0 0
  %146 = vmatpush1.bf16.msra.mxu0 %v131
  %147 = vmatprep.subr.bf16.mxu0 0
  %148 = vmatpush1.bf16.msra.mxu0 %v132
  %149 = vmatprep.subr.bf16.mxu0 0
  %150 = vmatpush1.bf16.msra.mxu0 0
  %151 = vmatprep.subr.bf16.mxu0 0
  %152 = vmatpush1.bf16.msra.mxu0 0
  %153 = vmatprep.subr.bf16.mxu0 0
  %154 = vmatpush1.bf16.msra.mxu0 0
  %155 = vmatprep.subr.bf16.mxu0 0
  %156 = vmatpush1.bf16.msra.mxu0 0
  %157 = vmatprep.subr.bf16.mxu0 0
  %158 = vmatpush1.bf16.msra.mxu0 0
  %159 = vmatprep.subr.bf16.mxu0 0
  %160 = vmatpush1.bf16.msra.mxu0 0
  %161 = vmatprep.subr.bf16.mxu0 0
  %162 = vmatpush1.bf16.msra.mxu0 0
  %163 = vmatprep.subr.bf16.mxu0 0
  %164 = vmatpush1.bf16.msra.mxu0 0
  %165 = vmatprep.subr.bf16.mxu0 0
  %166 = vmatpush1.bf16.msra.mxu0 0
  %167 = vmatprep.subr.bf16.mxu0 0
  %168 = vmatpush1.bf16.msra.mxu0 0
  %169 = vmatprep.subr.bf16.mxu0 0
  %170 = vmatpush1.bf16.msra.mxu0 0
  %171 = vmatprep.subr.bf16.mxu0 0
  %172 = vmatpush1.bf16.msra.mxu0 0
  %173 = vmatprep.mubr.bf16.mxu0 0
  %174 = vmatmul.mubr.bf16.gmra.mrb[0].mxu0 %v139
  %v175 = vpop.f32.mrb[0].mxu0
  %v176 = vadd.f32 %v111, %v175
  %v177 = vpop.f32.mrb[0].mxu0
  %v178 = vpop.f32.mrb[0].mxu0
  %v179 = vpop.f32.mrb[0].mxu0
  %180 = vdwg.mxu0
  %v181 = vmax.f32 %v176, 0.0
  %v182 = vpack.c.bf16 %v181, %v181
  %v183 = vld [vmem:[%s5] sm:$0xf]
  %v184 = vld [vmem:[%s5 + $0x4] sm:$0xf]
  %v185 = vld [vmem:[%s5 + $0x8] sm:$0xf]
  %v186 = vld [vmem:[%s5 + $0xc] sm:$0xf]
  %v187 = vld [vmem:[%s6] sm:$0x1]
  %v189 = vlaneseq
  %v190 = vshrl.u32 %v189, 7
  %v191 = vsub.s32 0, %v190
  %v192 = vrot.slane %v187, %v191
  %v198 = vunpack.c.l.b16 %v183
  %v199 = vunpack.c.l.b16 %v184
  %v200 = vunpack.c.l.b16 %v185
  %v201 = vunpack.c.l.b16 %v186
  %v202 = vpack.c.b16 %v199, %v198
  %v203 = vpack.c.b16 %v201, %v200
  %v207 = vsel %vm52, %v182, 0
  %209 = vmatprep.subr.bf16.mxu0 0
  %210 = vmatpush1.bf16.msra.mxu0 %v202
  %211 = vmatprep.subr.bf16.mxu0 0
  %212 = vmatpush1.bf16.msra.mxu0 %v203
  %213 = vmatprep.subr.bf16.mxu0 0
  %214 = vmatpush1.bf16.msra.mxu0 0
  %215 = vmatprep.subr.bf16.mxu0 0
  %216 = vmatpush1.bf16.msra.mxu0 0
  %217 = vmatprep.subr.bf16.mxu0 0
  %218 = vmatpush1.bf16.msra.mxu0 0
  %219 = vmatprep.subr.bf16.mxu0 0
  %220 = vmatpush1.bf16.msra.mxu0 0
  %221 = vmatprep.subr.bf16.mxu0 0
  %222 = vmatpush1.bf16.msra.mxu0 0
  %223 = vmatprep.subr.bf16.mxu0 0
  %224 = vmatpush1.bf16.msra.mxu0 0
  %225 = vmatprep.subr.bf16.mxu0 0
  %226 = vmatpush1.bf16.msra.mxu0 0
  %227 = vmatprep.subr.bf16.mxu0 0
  %228 = vmatpush1.bf16.msra.mxu0 0
  %229 = vmatprep.subr.bf16.mxu0 0
  %230 = vmatpush1.bf16.msra.mxu0 0
  %231 = vmatprep.subr.bf16.mxu0 0
  %232 = vmatpush1.bf16.msra.mxu0 0
  %233 = vmatprep.subr.bf16.mxu0 0
  %234 = vmatpush1.bf16.msra.mxu0 0
  %235 = vmatprep.subr.bf16.mxu0 0
  %236 = vmatpush1.bf16.msra.mxu0 0
  %237 = vmatprep.subr.bf16.mxu0 0
  %238 = vmatpush1.bf16.msra.mxu0 0
  %239 = vmatprep.subr.bf16.mxu0 0
  %240 = vmatpush1.bf16.msra.mxu0 0
  %241 = vmatprep.mubr.bf16.mxu0 0
  %242 = vmatmul.mubr.bf16.gmra.mrb[0].mxu0 %v207
  %v243 = vpop.f32.mrb[0].mxu0
  %v244 = vadd.f32 %v192, %v243
  %v245 = vpop.f32.mrb[0].mxu0
  %v246 = vpop.f32.mrb[0].mxu0
  %v247 = vpop.f32.mrb[0].mxu0
  %248 = vdwg.mxu0
  %vm249 = vcmask 15360
  %250 = vst.msk [vmem:[%s7] sm:$0xff] %vm249, %v244
  // Predicated region
  $region30: #{tpu_custom_call.1} parent=0 // pred_check
    _
  $region31: #{tpu_custom_call.1} parent=0 // pred_check_branch
    %252 = sbr.rel (0) target = $region33
  $region32: #{tpu_custom_call.1} parent=0 // pred_region
    _
  $region33: #{tpu_custom_call.1} parent=0 // pred_fallthru
    _
  // Predicated region
  $region34: #{tpu_custom_call.1} parent=0 // pred_check
    _
  $region35: #{tpu_custom_call.1} parent=0 // pred_check_branch
    %254 = sbr.rel (0) target = $region37
  $region36: #{tpu_custom_call.1} parent=0 // pred_region
    _
  $region37: #{tpu_custom_call.1} parent=0 // pred_fallthru
    _

</llo_original>
